<compile_context>
chip_gen: v7x
topology: tpu7x:2x2x1
jax: 0.10.0
libtpu: 0.0.40
codegen_flags: <defaults>
</compile_context>

<pallas_src>
import numpy as np
import jax
import jax.numpy as jnp
from jax.experimental import pallas as pl
from jax.experimental.pallas import tpu as pltpu

_LANE = 128            # batch elements per lane-row
_IN = 2                # fc1 input features
_HID = 8               # fc1 output features
_XW = _IN * _LANE      # 256 interleaved lanes per input row


def _deint_matrix():
    """Constant (256, 256) 0/1 matrix: columns 0..127 pick even (x0) lanes,
    columns 128..255 pick odd (x1) lanes."""
    eo = np.zeros((_XW, _XW), np.float32)
    cols = np.arange(_LANE)
    eo[2 * cols, cols] = 1.0
    eo[2 * cols + 1, cols + _LANE] = 1.0
    return jnp.asarray(eo, jnp.bfloat16)


def mlp_kernel(deint_ref, w1_ref, b1_ref, w2_ref, b2_ref, x_ref, o_ref):
    # x_ref:     (tr, 256) f32, lanes = [x0, x1, x0, x1, ...] for 128 batches/row
    # deint_ref: (256, 256) bf16 constant 0/1 de-interleave matrix
    # o_ref:     (tr, 128) f32
    xi = x_ref[...]

    # bf16 hi/lo split so the de-interleave matmul uses the fast native bf16 MXU
    # path on every generation while staying numerically exact to ~2e-6 relative.
    hi = xi.astype(jnp.bfloat16)
    lo = (xi - hi.astype(jnp.float32)).astype(jnp.bfloat16)
    eo = deint_ref[...]
    x01 = (jnp.dot(hi, eo, preferred_element_type=jnp.float32)
           + jnp.dot(lo, eo, preferred_element_type=jnp.float32))   # (tr, 256)
    x0 = x01[:, :_LANE]    # feature 0 for the 128 batch lanes
    x1 = x01[:, _LANE:]    # feature 1

    # Hoist the tiny fc weights out of the unrolled loop (SMEM scalar reads).
    w10 = [w1_ref[j, 0] for j in range(_HID)]
    w11 = [w1_ref[j, 1] for j in range(_HID)]
    b1v = [b1_ref[j] for j in range(_HID)]
    w2v = [w2_ref[j] for j in range(_HID)]

    # fc1 + ReLU + fc2 as 8 unrolled VPU FMAs, f32 accumulation.
    # TODO(synk): on v6e/v7x this loop could run in packed bf16 for ~2x VALU
    # throughput; kept in f32 so the result stays comfortably inside 1e-3.
    z = jnp.full(x0.shape, b2_ref[0], dtype=jnp.float32)
    for j in range(_HID):
        h = jnp.maximum(x0 * w10[j] + x1 * w11[j] + b1v[j], 0.0)
        z = z + h * w2v[j]

    # Exact sigmoid: exp on the EUP + true divide (exp overflow -> 1/inf = 0, correct limit).
    o_ref[...] = 1.0 / (1.0 + jnp.exp(-z))


def _grid_plan(nr, tile_rows):
    """(n_steps, rows_per_step): rows_per_step a multiple of 8 (or the full extent),
    and >= 2 steps whenever that costs no extra padding (v7x megacore / pipelining)."""
    if nr <= tile_rows:
        if nr >= 16 and nr % 16 == 0:
            return 2, nr // 2
        return 1, nr
    n_steps = pl.cdiv(nr, tile_rows)
    tr = 8 * pl.cdiv(pl.cdiv(nr, n_steps), 8)
    return n_steps, tr


def _forward_xla(x, w1, b1, w2, b2):
    # w1: (8, 2), b1: (8,), w2: (8,), b2: (1,)
    h = jnp.maximum(x @ w1.T + b1, 0.0)
    z = h @ w2[:, None] + b2
    return 1.0 / (1.0 + jnp.exp(-z))


def net_forward(x, w1, b1, w2, b2, *, tile_rows=2048, min_pallas_batch=1024):
    """x: (B, 2); w1: (8, 2) PyTorch layout; b1: (8,); w2: (1, 8); b2: (1,)."""
    x = jnp.asarray(x, jnp.float32)
    B = x.shape[0]

    w1_s = jnp.asarray(w1, jnp.float32).reshape(_HID, _IN)
    b1_s = jnp.asarray(b1, jnp.float32).reshape(_HID)
    w2_s = jnp.asarray(w2, jnp.float32).reshape(_HID)
    b2_s = jnp.asarray(b2, jnp.float32).reshape(1)

    # Small batches: pure fused XLA beats any kernel launch (review fast path).
    if B < max(min_pallas_batch, 1):
        return _forward_xla(x, w1_s, b1_s, w2_s, b2_s)

    nr = pl.cdiv(B, _LANE)                   # rows of 128 batch elements
    n_steps, tr = _grid_plan(nr, tile_rows)
    nr_pad = n_steps * tr
    b_pad = nr_pad * _LANE

    # Pad only when the batch is not lane/tile aligned; otherwise zero extra passes.
    x_p = x if b_pad == B else jnp.pad(x, ((0, b_pad - B), (0, 0)))
    xi = x_p.reshape(nr_pad, _XW)            # free row-major reshape, no transpose

    smem = pl.BlockSpec(memory_space=pltpu.MemorySpace.SMEM)

    # VMEM per step (tile_rows=2048): 2 MiB in + 1 MiB out + 0.13 MiB const,
    # double-buffered ~6.3 MiB -> fits every generation's scoped-VMEM default.
    out = pl.pallas_call(
        mlp_kernel,
        out_shape=jax.ShapeDtypeStruct((nr_pad, _LANE), jnp.float32),
        grid=(n_steps,),
        in_specs=[
            pl.BlockSpec((_XW, _XW), lambda i: (0, 0)),     # de-interleave constant
            smem, smem, smem, smem,                         # w1, b1, w2, b2
            pl.BlockSpec((tr, _XW), lambda i: (i, 0)),      # interleaved x slab
        ],
        out_specs=pl.BlockSpec((tr, _LANE), lambda i: (i, 0)),
        compiler_params=pltpu.CompilerParams(
            dimension_semantics=("parallel",)),
    )(_deint_matrix(), w1_s, b1_s, w2_s, b2_s, xi)

    res = out.reshape(b_pad, 1)              # free reshape; slice only if padded
    return res if b_pad == B else res[:B]


def _ref_forward(x, w1, b1, w2, b2):
    # PyTorch-layout reference: w1 (8, 2), b1 (8,), w2 (1, 8), b2 (1,)
    h = jnp.maximum(x @ w1.T + b1, 0.0)
    z = h @ w2.T + b2
    return 1.0 / (1.0 + jnp.exp(-z))


if __name__ == "__main__":
    key = jax.random.PRNGKey(0)
    kx, k1, k2, k3, k4 = jax.random.split(key, 5)

    # Parameters (shapes from Net.__init__: fc1 = Linear(2, 8), fc2 = Linear(8, 1)).
    w1 = jax.random.normal(k1, (8, 2), dtype=jnp.float32) * 0.5
    b1 = jax.random.normal(k2, (8,), dtype=jnp.float32) * 0.1
    w2 = jax.random.normal(k3, (1, 8), dtype=jnp.float32) * 0.5
    b2 = jax.random.normal(k4, (1,), dtype=jnp.float32) * 0.1

    checks = [
        (8, dict()),                        # tiny batch -> fused XLA fast path
        (1000, dict(min_pallas_batch=1)),   # Pallas path, ragged batch (padded + sliced)
        (8192, dict()),                     # Pallas path, lane-aligned, 2 grid steps
    ]
    for B, kwargs in checks:
        xb = jax.random.normal(kx, (B, _IN), dtype=jnp.float32)
        out = net_forward(xb, w1, b1, w2, b2, **kwargs)
        out = jax.block_until_ready(out)
        ref = _ref_forward(xb, w1, b1, w2, b2)
        assert out.shape == (B, 1), (out.shape, B)
        assert jnp.allclose(out, ref, atol=1e-3), f"mismatch vs reference (B={B})"

    print("KERNEL_OK")
</pallas_src>

<mosaic_0001>
module attributes {stable_mosaic.version = 11 : i64} {
  func.func @mlp_kernel(%arg0: i32, %arg1: memref<256x256xbf16, #tpu.memory_space<vmem>>, %arg2: memref<8x2xf32, #tpu.memory_space<smem>>, %arg3: memref<8xf32, #tpu.memory_space<smem>>, %arg4: memref<8xf32, #tpu.memory_space<smem>>, %arg5: memref<1xf32, #tpu.memory_space<smem>>, %arg6: memref<8x256xf32, #tpu.memory_space<vmem>>, %arg7: memref<8x128xf32, #tpu.memory_space<vmem>>) attributes {dimension_semantics = [#tpu.dimension_semantics<parallel>], iteration_bounds = array<i64: 1>, scalar_prefetch = 0 : i64, scratch_operands = 0 : i64, tpu.core_type = #tpu.core_type<tc>, window_params = [{pipeline_mode = #tpu.pipeline_mode<synchronous>, transform_indices = @transform_0, window_bounds = array<i64: 256, 256>}, {transform_indices = @transform_1, window_bounds = array<i64: 8, 2>}, {transform_indices = @transform_2, window_bounds = array<i64: 8>}, {transform_indices = @transform_3, window_bounds = array<i64: 8>}, {transform_indices = @transform_4, window_bounds = array<i64: 1>}, {transform_indices = @transform_5, window_bounds = array<i64: 8, 256>}, {transform_indices = @transform_6, window_bounds = array<i64: 8, 128>}]} {
    %c0 = arith.constant 0 : index
    %c0_0 = arith.constant 0 : index
    %0 = vector.load %arg6[%c0, %c0_0] : memref<8x256xf32, #tpu.memory_space<vmem>>, vector<8x256xf32>
    %1 = arith.truncf %0 : vector<8x256xf32> to vector<8x256xbf16>
    %2 = arith.extf %1 : vector<8x256xbf16> to vector<8x256xf32>
    %3 = arith.subf %0, %2 : vector<8x256xf32>
    %4 = arith.truncf %3 : vector<8x256xf32> to vector<8x256xbf16>
    %c0_1 = arith.constant 0 : index
    %c0_2 = arith.constant 0 : index
    %5 = vector.load %arg1[%c0_1, %c0_2] : memref<256x256xbf16, #tpu.memory_space<vmem>>, vector<256x256xbf16>
    %cst = arith.constant dense<0.000000e+00> : vector<8x256xf32>
    %6 = tpu.matmul %1, %5, %cst {dimension_numbers = #tpu.dot_dimension_numbers<[1], [0], [0], [1], [0, 0, 1, 1], [], []>} : vector<8x256xbf16>, vector<256x256xbf16>, vector<8x256xf32> -> vector<8x256xf32>
    %cst_3 = arith.constant dense<0.000000e+00> : vector<8x256xf32>
    %7 = tpu.matmul %4, %5, %cst_3 {dimension_numbers = #tpu.dot_dimension_numbers<[1], [0], [0], [1], [0, 0, 1, 1], [], []>} : vector<8x256xbf16>, vector<256x256xbf16>, vector<8x256xf32> -> vector<8x256xf32>
    %8 = arith.addf %6, %7 : vector<8x256xf32>
    %9 = vector.extract_strided_slice %8 {offsets = [0, 0], sizes = [8, 128], strides = [1, 1]} : vector<8x256xf32> to vector<8x128xf32>
    %10 = vector.extract_strided_slice %8 {offsets = [0, 128], sizes = [8, 128], strides = [1, 1]} : vector<8x256xf32> to vector<8x128xf32>
    %c0_4 = arith.constant 0 : index
    %c0_5 = arith.constant 0 : index
    %11 = memref.load %arg2[%c0_4, %c0_5] : memref<8x2xf32, #tpu.memory_space<smem>>
    %c1 = arith.constant 1 : index
    %c0_6 = arith.constant 0 : index
    %12 = memref.load %arg2[%c1, %c0_6] : memref<8x2xf32, #tpu.memory_space<smem>>
    %c2 = arith.constant 2 : index
    %c0_7 = arith.constant 0 : index
    %13 = memref.load %arg2[%c2, %c0_7] : memref<8x2xf32, #tpu.memory_space<smem>>
    %c3 = arith.constant 3 : index
    %c0_8 = arith.constant 0 : index
    %14 = memref.load %arg2[%c3, %c0_8] : memref<8x2xf32, #tpu.memory_space<smem>>
    %c4 = arith.constant 4 : index
    %c0_9 = arith.constant 0 : index
    %15 = memref.load %arg2[%c4, %c0_9] : memref<8x2xf32, #tpu.memory_space<smem>>
    %c5 = arith.constant 5 : index
    %c0_10 = arith.constant 0 : index
    %16 = memref.load %arg2[%c5, %c0_10] : memref<8x2xf32, #tpu.memory_space<smem>>
    %c6 = arith.constant 6 : index
    %c0_11 = arith.constant 0 : index
    %17 = memref.load %arg2[%c6, %c0_11] : memref<8x2xf32, #tpu.memory_space<smem>>
    %c7 = arith.constant 7 : index
    %c0_12 = arith.constant 0 : index
    %18 = memref.load %arg2[%c7, %c0_12] : memref<8x2xf32, #tpu.memory_space<smem>>
    %c0_13 = arith.constant 0 : index
    %c1_14 = arith.constant 1 : index
    %19 = memref.load %arg2[%c0_13, %c1_14] : memref<8x2xf32, #tpu.memory_space<smem>>
    %c1_15 = arith.constant 1 : index
    %c1_16 = arith.constant 1 : index
    %20 = memref.load %arg2[%c1_15, %c1_16] : memref<8x2xf32, #tpu.memory_space<smem>>
    %c2_17 = arith.constant 2 : index
    %c1_18 = arith.constant 1 : index
    %21 = memref.load %arg2[%c2_17, %c1_18] : memref<8x2xf32, #tpu.memory_space<smem>>
    %c3_19 = arith.constant 3 : index
    %c1_20 = arith.constant 1 : index
    %22 = memref.load %arg2[%c3_19, %c1_20] : memref<8x2xf32, #tpu.memory_space<smem>>
    %c4_21 = arith.constant 4 : index
    %c1_22 = arith.constant 1 : index
    %23 = memref.load %arg2[%c4_21, %c1_22] : memref<8x2xf32, #tpu.memory_space<smem>>
    %c5_23 = arith.constant 5 : index
    %c1_24 = arith.constant 1 : index
    %24 = memref.load %arg2[%c5_23, %c1_24] : memref<8x2xf32, #tpu.memory_space<smem>>
    %c6_25 = arith.constant 6 : index
    %c1_26 = arith.constant 1 : index
    %25 = memref.load %arg2[%c6_25, %c1_26] : memref<8x2xf32, #tpu.memory_space<smem>>
    %c7_27 = arith.constant 7 : index
    %c1_28 = arith.constant 1 : index
    %26 = memref.load %arg2[%c7_27, %c1_28] : memref<8x2xf32, #tpu.memory_space<smem>>
    %c0_29 = arith.constant 0 : index
    %27 = memref.load %arg3[%c0_29] : memref<8xf32, #tpu.memory_space<smem>>
    %c1_30 = arith.constant 1 : index
    %28 = memref.load %arg3[%c1_30] : memref<8xf32, #tpu.memory_space<smem>>
    %c2_31 = arith.constant 2 : index
    %29 = memref.load %arg3[%c2_31] : memref<8xf32, #tpu.memory_space<smem>>
    %c3_32 = arith.constant 3 : index
    %30 = memref.load %arg3[%c3_32] : memref<8xf32, #tpu.memory_space<smem>>
    %c4_33 = arith.constant 4 : index
    %31 = memref.load %arg3[%c4_33] : memref<8xf32, #tpu.memory_space<smem>>
    %c5_34 = arith.constant 5 : index
    %32 = memref.load %arg3[%c5_34] : memref<8xf32, #tpu.memory_space<smem>>
    %c6_35 = arith.constant 6 : index
    %33 = memref.load %arg3[%c6_35] : memref<8xf32, #tpu.memory_space<smem>>
    %c7_36 = arith.constant 7 : index
    %34 = memref.load %arg3[%c7_36] : memref<8xf32, #tpu.memory_space<smem>>
    %c0_37 = arith.constant 0 : index
    %35 = memref.load %arg4[%c0_37] : memref<8xf32, #tpu.memory_space<smem>>
    %c1_38 = arith.constant 1 : index
    %36 = memref.load %arg4[%c1_38] : memref<8xf32, #tpu.memory_space<smem>>
    %c2_39 = arith.constant 2 : index
    %37 = memref.load %arg4[%c2_39] : memref<8xf32, #tpu.memory_space<smem>>
    %c3_40 = arith.constant 3 : index
    %38 = memref.load %arg4[%c3_40] : memref<8xf32, #tpu.memory_space<smem>>
    %c4_41 = arith.constant 4 : index
    %39 = memref.load %arg4[%c4_41] : memref<8xf32, #tpu.memory_space<smem>>
    %c5_42 = arith.constant 5 : index
    %40 = memref.load %arg4[%c5_42] : memref<8xf32, #tpu.memory_space<smem>>
    %c6_43 = arith.constant 6 : index
    %41 = memref.load %arg4[%c6_43] : memref<8xf32, #tpu.memory_space<smem>>
    %c7_44 = arith.constant 7 : index
    %42 = memref.load %arg4[%c7_44] : memref<8xf32, #tpu.memory_space<smem>>
    %c0_45 = arith.constant 0 : index
    %43 = memref.load %arg5[%c0_45] : memref<1xf32, #tpu.memory_space<smem>>
    %44 = vector.broadcast %43 : f32 to vector<8x128xf32>
    %45 = vector.broadcast %11 : f32 to vector<8x128xf32>
    %46 = arith.mulf %9, %45 : vector<8x128xf32>
    %47 = vector.broadcast %19 : f32 to vector<8x128xf32>
    %48 = arith.mulf %10, %47 : vector<8x128xf32>
    %49 = arith.addf %46, %48 : vector<8x128xf32>
    %50 = vector.broadcast %27 : f32 to vector<8x128xf32>
    %51 = arith.addf %49, %50 : vector<8x128xf32>
    %cst_46 = arith.constant 0.000000e+00 : f32
    %52 = vector.broadcast %cst_46 : f32 to vector<8x128xf32>
    %53 = arith.maximumf %51, %52 : vector<8x128xf32>
    %54 = vector.broadcast %35 : f32 to vector<8x128xf32>
    %55 = arith.mulf %53, %54 : vector<8x128xf32>
    %56 = arith.addf %44, %55 : vector<8x128xf32>
    %57 = vector.broadcast %12 : f32 to vector<8x128xf32>
    %58 = arith.mulf %9, %57 : vector<8x128xf32>
    %59 = vector.broadcast %20 : f32 to vector<8x128xf32>
    %60 = arith.mulf %10, %59 : vector<8x128xf32>
    %61 = arith.addf %58, %60 : vector<8x128xf32>
    %62 = vector.broadcast %28 : f32 to vector<8x128xf32>
    %63 = arith.addf %61, %62 : vector<8x128xf32>
    %cst_47 = arith.constant 0.000000e+00 : f32
    %64 = vector.broadcast %cst_47 : f32 to vector<8x128xf32>
    %65 = arith.maximumf %63, %64 : vector<8x128xf32>
    %66 = vector.broadcast %36 : f32 to vector<8x128xf32>
    %67 = arith.mulf %65, %66 : vector<8x128xf32>
    %68 = arith.addf %56, %67 : vector<8x128xf32>
    %69 = vector.broadcast %13 : f32 to vector<8x128xf32>
    %70 = arith.mulf %9, %69 : vector<8x128xf32>
    %71 = vector.broadcast %21 : f32 to vector<8x128xf32>
    %72 = arith.mulf %10, %71 : vector<8x128xf32>
    %73 = arith.addf %70, %72 : vector<8x128xf32>
    %74 = vector.broadcast %29 : f32 to vector<8x128xf32>
    %75 = arith.addf %73, %74 : vector<8x128xf32>
    %cst_48 = arith.constant 0.000000e+00 : f32
    %76 = vector.broadcast %cst_48 : f32 to vector<8x128xf32>
    %77 = arith.maximumf %75, %76 : vector<8x128xf32>
    %78 = vector.broadcast %37 : f32 to vector<8x128xf32>
    %79 = arith.mulf %77, %78 : vector<8x128xf32>
    %80 = arith.addf %68, %79 : vector<8x128xf32>
    %81 = vector.broadcast %14 : f32 to vector<8x128xf32>
    %82 = arith.mulf %9, %81 : vector<8x128xf32>
    %83 = vector.broadcast %22 : f32 to vector<8x128xf32>
    %84 = arith.mulf %10, %83 : vector<8x128xf32>
    %85 = arith.addf %82, %84 : vector<8x128xf32>
    %86 = vector.broadcast %30 : f32 to vector<8x128xf32>
    %87 = arith.addf %85, %86 : vector<8x128xf32>
    %cst_49 = arith.constant 0.000000e+00 : f32
    %88 = vector.broadcast %cst_49 : f32 to vector<8x128xf32>
    %89 = arith.maximumf %87, %88 : vector<8x128xf32>
    %90 = vector.broadcast %38 : f32 to vector<8x128xf32>
    %91 = arith.mulf %89, %90 : vector<8x128xf32>
    %92 = arith.addf %80, %91 : vector<8x128xf32>
    %93 = vector.broadcast %15 : f32 to vector<8x128xf32>
    %94 = arith.mulf %9, %93 : vector<8x128xf32>
    %95 = vector.broadcast %23 : f32 to vector<8x128xf32>
    %96 = arith.mulf %10, %95 : vector<8x128xf32>
    %97 = arith.addf %94, %96 : vector<8x128xf32>
    %98 = vector.broadcast %31 : f32 to vector<8x128xf32>
    %99 = arith.addf %97, %98 : vector<8x128xf32>
    %cst_50 = arith.constant 0.000000e+00 : f32
    %100 = vector.broadcast %cst_50 : f32 to vector<8x128xf32>
    %101 = arith.maximumf %99, %100 : vector<8x128xf32>
    %102 = vector.broadcast %39 : f32 to vector<8x128xf32>
    %103 = arith.mulf %101, %102 : vector<8x128xf32>
    %104 = arith.addf %92, %103 : vector<8x128xf32>
    %105 = vector.broadcast %16 : f32 to vector<8x128xf32>
    %106 = arith.mulf %9, %105 : vector<8x128xf32>
    %107 = vector.broadcast %24 : f32 to vector<8x128xf32>
    %108 = arith.mulf %10, %107 : vector<8x128xf32>
    %109 = arith.addf %106, %108 : vector<8x128xf32>
    %110 = vector.broadcast %32 : f32 to vector<8x128xf32>
    %111 = arith.addf %109, %110 : vector<8x128xf32>
    %cst_51 = arith.constant 0.000000e+00 : f32
    %112 = vector.broadcast %cst_51 : f32 to vector<8x128xf32>
    %113 = arith.maximumf %111, %112 : vector<8x128xf32>
    %114 = vector.broadcast %40 : f32 to vector<8x128xf32>
    %115 = arith.mulf %113, %114 : vector<8x128xf32>
    %116 = arith.addf %104, %115 : vector<8x128xf32>
    %117 = vector.broadcast %17 : f32 to vector<8x128xf32>
    %118 = arith.mulf %9, %117 : vector<8x128xf32>
    %119 = vector.broadcast %25 : f32 to vector<8x128xf32>
    %120 = arith.mulf %10, %119 : vector<8x128xf32>
    %121 = arith.addf %118, %120 : vector<8x128xf32>
    %122 = vector.broadcast %33 : f32 to vector<8x128xf32>
    %123 = arith.addf %121, %122 : vector<8x128xf32>
    %cst_52 = arith.constant 0.000000e+00 : f32
    %124 = vector.broadcast %cst_52 : f32 to vector<8x128xf32>
    %125 = arith.maximumf %123, %124 : vector<8x128xf32>
    %126 = vector.broadcast %41 : f32 to vector<8x128xf32>
    %127 = arith.mulf %125, %126 : vector<8x128xf32>
    %128 = arith.addf %116, %127 : vector<8x128xf32>
    %129 = vector.broadcast %18 : f32 to vector<8x128xf32>
    %130 = arith.mulf %9, %129 : vector<8x128xf32>
    %131 = vector.broadcast %26 : f32 to vector<8x128xf32>
    %132 = arith.mulf %10, %131 : vector<8x128xf32>
    %133 = arith.addf %130, %132 : vector<8x128xf32>
    %134 = vector.broadcast %34 : f32 to vector<8x128xf32>
    %135 = arith.addf %133, %134 : vector<8x128xf32>
    %cst_53 = arith.constant 0.000000e+00 : f32
    %136 = vector.broadcast %cst_53 : f32 to vector<8x128xf32>
    %137 = arith.maximumf %135, %136 : vector<8x128xf32>
    %138 = vector.broadcast %42 : f32 to vector<8x128xf32>
    %139 = arith.mulf %137, %138 : vector<8x128xf32>
    %140 = arith.addf %128, %139 : vector<8x128xf32>
    %cst_54 = arith.constant 0.000000e+00 : f32
    %141 = vector.broadcast %cst_54 : f32 to vector<8x128xf32>
    %142 = arith.subf %141, %140 : vector<8x128xf32>
    %143 = math.exp %142 : vector<8x128xf32>
    %cst_55 = arith.constant 1.000000e+00 : f32
    %144 = vector.broadcast %cst_55 : f32 to vector<8x128xf32>
    %145 = arith.addf %144, %143 : vector<8x128xf32>
    %cst_56 = arith.constant 1.000000e+00 : f32
    %146 = vector.broadcast %cst_56 : f32 to vector<8x128xf32>
    %147 = arith.divf %146, %145 : vector<8x128xf32>
    %c0_57 = arith.constant 0 : index
    %c0_58 = arith.constant 0 : index
    %148 = vector.load %arg7[%c0_57, %c0_58] : memref<8x128xf32, #tpu.memory_space<vmem>>, vector<8x128xf32>
    tpu.vector_store %arg7[%c0_57, %c0_58], %147 {strides = array<i32>} : memref<8x128xf32, #tpu.memory_space<vmem>>, vector<8x128xf32>,
    return
  }
  func.func @transform_0(%arg0: i32) -> (i32, i32) {
    %c0_i32 = arith.constant 0 : i32
    %c0_i32_0 = arith.constant 0 : i32
    %c0_i32_1 = arith.constant 0 : i32
    return %c0_i32, %c0_i32_0 : i32, i32
  }
  func.func @transform_1(%arg0: i32) -> (i32, i32) {
    %c0_i32 = arith.constant 0 : i32
    %c0_i32_0 = arith.constant 0 : i32
    %c0_i32_1 = arith.constant 0 : i32
    return %c0_i32, %c0_i32_0 : i32, i32
  }
  func.func @transform_2(%arg0: i32) -> i32 {
    %c0_i32 = arith.constant 0 : i32
    %c0_i32_0 = arith.constant 0 : i32
    return %c0_i32 : i32
  }
  func.func @transform_3(%arg0: i32) -> i32 {
    %c0_i32 = arith.constant 0 : i32
    %c0_i32_0 = arith.constant 0 : i32
    return %c0_i32 : i32
  }
  func.func @transform_4(%arg0: i32) -> i32 {
    %c0_i32 = arith.constant 0 : i32
    %c0_i32_0 = arith.constant 0 : i32
    return %c0_i32 : i32
  }
  func.func @transform_5(%arg0: i32) -> (i32, i32) {
    %c0_i32 = arith.constant 0 : i32
    %c0_i32_0 = arith.constant 0 : i32
    return %arg0, %c0_i32 : i32, i32
  }
  func.func @transform_6(%arg0: i32) -> (i32, i32) {
    %c0_i32 = arith.constant 0 : i32
    %c0_i32_0 = arith.constant 0 : i32
    return %arg0, %c0_i32 : i32, i32
  }
}

</mosaic_0001>

<llo_original>
// kernel: tpu_custom_call.1
$region0: #{tpu_custom_call.1}
  #allocation0 [shape = 'u32[]', space=smem, size = 0x4, offset = 0x4, fixed_abs, tag = 'smem constant byte address 0x4 - core index']
  #allocation1 [shape = 'u32[144,128]{1,0:T(1,128)}', space=vmem, size = 0x12000, scoped, tag = 'internal scratch']
  #allocation2 [shape = 'f32[1]{0:T(128)S(6)}', space=smem, size = 0x200, scoped, tag = 'scoped memory for tpu_custom_call.1']
  %s0 = inlined_call_operand.hbm [shape: bf16[256,256], index: 0, kind: input, shape index: {}]
  %s1 = inlined_call_operand.vmem [shape: f32[8,2], index: 1, kind: input, shape index: {}]
  %s2 = inlined_call_operand.vmem [shape: f32[8], index: 2, kind: input, shape index: {}]
  %s3 = inlined_call_operand.vmem [shape: f32[8], index: 3, kind: input, shape index: {}]
  %s4 = inlined_call_operand.<no memory space> [shape: f32[1], index: 4, kind: input, shape index: {}]
  %s5 = inlined_call_operand.vmem [shape: f32[8,256], index: 5, kind: input, shape index: {}]
  %s6 = inlined_call_operand.hbm [shape: f32[8,128], index: 6, kind: output, shape index: {}]
  %s7 = sld [smem:[#allocation0]]
  $region50: #{tpu_custom_call.1} parent=0
    _
  %s9 = ssub.s32 1, %s7
  %s10 = scalar_select 0, %s9, %s7
  %11 = sst [smem:[#allocation2]] %s4
  $region1: #{tpu_custom_call.1} parent=0
    #allocation3 [shape = 'u8[131072]{0}', space=vmem, size = 0x20000, scoped, tag = 'input window, operand 0, single buffered']
    #allocation4 [shape = 's32[1]{0}', space=sflag, size = 0x4, scoped, tag = 'scoped memory for tpu_custom_call.1']
    #allocation5 [shape = 's32[1]{0}', space=sflag, size = 0x4, scoped, tag = 'scoped memory for tpu_custom_call.1']
    #allocation6 [shape = 's32[1]{0}', space=sflag, size = 0x4, scoped, tag = 'scoped memory for tpu_custom_call.1']
    #allocation7 [shape = 'u8[4096]{0}', space=smem, size = 0x1000, scoped, tag = 'input window, operand 1, single buffered']
    #allocation8 [shape = 'u8[512]{0}', space=smem, size = 0x200, scoped, tag = 'input window, operand 2, single buffered']
    #allocation9 [shape = 's32[1]{0}', space=sflag, size = 0x4, scoped, tag = 'scoped memory for tpu_custom_call.1']
    #allocation10 [shape = 'u8[512]{0}', space=smem, size = 0x200, scoped, tag = 'input window, operand 3, single buffered']
    #allocation11 [shape = 'u8[4096]{0}', space=vmem, size = 0x1000, scoped, tag = 'output window, operand 0, single buffered']
    %12 = vsyncpa [#allocation4], 0
    %13 = vsyncpa [#allocation6], 0
    %14 = vsyncpa [#allocation9], 0
    %15 = vsyncpa [#allocation5], 0
    // Predicated region
    $region2: #{tpu_custom_call.1} parent=1 // pred_check
      _
    $region3: #{tpu_custom_call.1} parent=1 // pred_check_branch
      %17 = sbr.rel (0) target = $region5
    $region4: #{tpu_custom_call.1} parent=1 // pred_region
      %s19 = ssub.s32 4096, 4096
      %20 = vsyncadd [#allocation4], %s19
      %s21 = sshll.u32 [#allocation3], 4
      %s22 = int_to_ptr.vmem [resolvable:$true] %s21
      %27 = dma.hbm_to_vmem [thread:$0]  %s0, 4096, %s22, [#allocation4], 128, 128, 8
    $region5: #{tpu_custom_call.1} parent=1 // pred_fallthru
      _
    // Predicated region
    $region6: #{tpu_custom_call.1} parent=1 // pred_check
      _
    $region7: #{tpu_custom_call.1} parent=1 // pred_check_branch
      %29 = sbr.rel (0) target = $region9
    $region8: #{tpu_custom_call.1} parent=1 // pred_region
      %s31 = ssub.s32 128, 128
      %32 = vsyncadd [#allocation6], %s31
      %s34 = sshll.u32 %s1, 4
      %s35 = int_to_ptr.vmem [resolvable:$true] %s34
      %37 = dma.vmem_to_smem %s35, 128, [#allocation7], [#allocation6]
    $region9: #{tpu_custom_call.1} parent=1 // pred_fallthru
      _
    // Predicated region
    $region10: #{tpu_custom_call.1} parent=1 // pred_check
      _
    $region11: #{tpu_custom_call.1} parent=1 // pred_check_branch
      %39 = sbr.rel (0) target = $region13
    $region12: #{tpu_custom_call.1} parent=1 // pred_region
      %s41 = ssub.s32 16, 16
      %42 = vsyncadd [#allocation9], %s41
      %s44 = sshll.u32 %s2, 4
      %s45 = int_to_ptr.vmem [resolvable:$true] %s44
      %47 = dma.vmem_to_smem %s45, 16, [#allocation8], [#allocation9]
    $region13: #{tpu_custom_call.1} parent=1 // pred_fallthru
      _
    // Predicated region
    $region14: #{tpu_custom_call.1} parent=1 // pred_check
      _
    $region15: #{tpu_custom_call.1} parent=1 // pred_check_branch
      %49 = sbr.rel (0) target = $region17
    $region16: #{tpu_custom_call.1} parent=1 // pred_region
      %s51 = ssub.s32 16, 16
      %52 = vsyncadd [#allocation9], %s51
      %s54 = sshll.u32 %s3, 4
      %s55 = int_to_ptr.vmem [resolvable:$true] %s54
      %57 = dma.vmem_to_smem %s55, 16, [#allocation10], [#allocation9]
    $region17: #{tpu_custom_call.1} parent=1 // pred_fallthru
      _
    // Predicated region
    $region18: #{tpu_custom_call.1} parent=1 // pred_check
      _
    $region19: #{tpu_custom_call.1} parent=1 // pred_check_branch
      %59 = sbr.rel (0) target = $region21
    $region20: #{tpu_custom_call.1} parent=1 // pred_region
      _
    $region21: #{tpu_custom_call.1} parent=1 // pred_fallthru
      _
    // Predicated region
    $region22: #{tpu_custom_call.1} parent=1 // pred_check
      _
    $region23: #{tpu_custom_call.1} parent=1 // pred_check_branch
      %61 = sbr.rel (0) target = $region25
    $region24: #{tpu_custom_call.1} parent=1 // pred_region
      _
    $region25: #{tpu_custom_call.1} parent=1 // pred_fallthru
      _
    // Predicated region
    $region26: #{tpu_custom_call.1} parent=1 // pred_check
      _
    $region27: #{tpu_custom_call.1} parent=1 // pred_check_branch
      %63 = sbr.rel (0) target = $region29
    $region28: #{tpu_custom_call.1} parent=1 // pred_region
      %64 = dma.done [#allocation4], 4096
    $region29: #{tpu_custom_call.1} parent=1 // pred_fallthru
      _
    // Predicated region
    $region30: #{tpu_custom_call.1} parent=1 // pred_check
      _
    $region31: #{tpu_custom_call.1} parent=1 // pred_check_branch
      %66 = sbr.rel (0) target = $region33
    $region32: #{tpu_custom_call.1} parent=1 // pred_region
      %67 = dma.done [#allocation6], 128
    $region33: #{tpu_custom_call.1} parent=1 // pred_fallthru
      _
    // Predicated region
    $region34: #{tpu_custom_call.1} parent=1 // pred_check
      _
    $region35: #{tpu_custom_call.1} parent=1 // pred_check_branch
      %69 = sbr.rel (0) target = $region37
    $region36: #{tpu_custom_call.1} parent=1 // pred_region
      %70 = dma.done [#allocation9], 16
    $region37: #{tpu_custom_call.1} parent=1 // pred_fallthru
      _
    // Predicated region
    $region38: #{tpu_custom_call.1} parent=1 // pred_check
      _
    $region39: #{tpu_custom_call.1} parent=1 // pred_check_branch
      %72 = sbr.rel (0) target = $region41
    $region40: #{tpu_custom_call.1} parent=1 // pred_region
      %73 = dma.done [#allocation9], 16
    $region41: #{tpu_custom_call.1} parent=1 // pred_fallthru
      _
    %74 = sfence
    %v75 = vld [vmem:[%s5] sm:$0xff]
    %v76 = vld [vmem:[%s5 + $0x8] sm:$0xff]
    %v77 = vpack.c.bf16 %v75, %v75
    %v78 = vpack.c.bf16 %v76, %v76
    %v79 = vunpack.c.l.bf16 %v77
    %v80 = vunpack.c.l.bf16 %v78
    %v81 = vsub.f32 %v75, %v79
    %v82 = vsub.f32 %v76, %v80
    %v83 = vpack.c.bf16 %v81, %v81
    %v84 = vpack.c.bf16 %v82, %v82
    %v85 = vld [vmem:[#allocation3] sm:$0xff]
    %v86 = vld [vmem:[#allocation3 + $0x8] sm:$0xff]
    %v87 = vld [vmem:[#allocation3 + $0x10] sm:$0xff]
    %v88 = vld [vmem:[#allocation3 + $0x18] sm:$0xff]
    %v89 = vld [vmem:[#allocation3 + $0x20] sm:$0xff]
    %v90 = vld [vmem:[#allocation3 + $0x28] sm:$0xff]
    %v91 = vld [vmem:[#allocation3 + $0x30] sm:$0xff]
    %v92 = vld [vmem:[#allocation3 + $0x38] sm:$0xff]
    %v93 = vld [vmem:[#allocation3 + $0x40] sm:$0xff]
    %v94 = vld [vmem:[#allocation3 + $0x48] sm:$0xff]
    %v95 = vld [vmem:[#allocation3 + $0x50] sm:$0xff]
    %v96 = vld [vmem:[#allocation3 + $0x58] sm:$0xff]
    %v97 = vld [vmem:[#allocation3 + $0x60] sm:$0xff]
    %v98 = vld [vmem:[#allocation3 + $0x68] sm:$0xff]
    %v99 = vld [vmem:[#allocation3 + $0x70] sm:$0xff]
    %v100 = vld [vmem:[#allocation3 + $0x78] sm:$0xff]
    %v101 = vld [vmem:[#allocation3 + $0x80] sm:$0xff]
    %v102 = vld [vmem:[#allocation3 + $0x88] sm:$0xff]
    %v103 = vld [vmem:[#allocation3 + $0x90] sm:$0xff]
    %v104 = vld [vmem:[#allocation3 + $0x98] sm:$0xff]
    %v105 = vld [vmem:[#allocation3 + $0xa0] sm:$0xff]
    %v106 = vld [vmem:[#allocation3 + $0xa8] sm:$0xff]
    %v107 = vld [vmem:[#allocation3 + $0xb0] sm:$0xff]
    %v108 = vld [vmem:[#allocation3 + $0xb8] sm:$0xff]
    %v109 = vld [vmem:[#allocation3 + $0xc0] sm:$0xff]
    %v110 = vld [vmem:[#allocation3 + $0xc8] sm:$0xff]
    %v111 = vld [vmem:[#allocation3 + $0xd0] sm:$0xff]
    %v112 = vld [vmem:[#allocation3 + $0xd8] sm:$0xff]
    %v113 = vld [vmem:[#allocation3 + $0xe0] sm:$0xff]
    %v114 = vld [vmem:[#allocation3 + $0xe8] sm:$0xff]
    %v115 = vld [vmem:[#allocation3 + $0xf0] sm:$0xff]
    %v116 = vld [vmem:[#allocation3 + $0xf8] sm:$0xff]
    %v149 = vunpack.c.l.b16 %v85
    %v150 = vunpack.c.h.b16 %v85
    %v151 = vunpack.c.l.b16 %v86
    %v152 = vunpack.c.h.b16 %v86
    %v153 = vunpack.c.l.b16 %v87
    %v154 = vunpack.c.h.b16 %v87
    %v155 = vunpack.c.l.b16 %v88
    %v156 = vunpack.c.h.b16 %v88
    %v157 = vunpack.c.l.b16 %v89
    %v158 = vunpack.c.h.b16 %v89
    %v159 = vunpack.c.l.b16 %v90
    %v160 = vunpack.c.h.b16 %v90
    %v161 = vunpack.c.l.b16 %v91
    %v162 = vunpack.c.h.b16 %v91
    %v163 = vunpack.c.l.b16 %v92
    %v164 = vunpack.c.h.b16 %v92
    %v165 = vunpack.c.l.b16 %v93
    %v166 = vunpack.c.h.b16 %v93
    %v167 = vunpack.c.l.b16 %v94
    %v168 = vunpack.c.h.b16 %v94
    %v169 = vunpack.c.l.b16 %v95
    %v170 = vunpack.c.h.b16 %v95
    %v171 = vunpack.c.l.b16 %v96
    %v172 = vunpack.c.h.b16 %v96
    %v173 = vunpack.c.l.b16 %v97
    %v174 = vunpack.c.h.b16 %v97
    %v175 = vunpack.c.l.b16 %v98
    %v176 = vunpack.c.h.b16 %v98
    %v177 = vunpack.c.l.b16 %v99
    %v178 = vunpack.c.h.b16 %v99
    %v179 = vunpack.c.l.b16 %v100
    %v180 = vunpack.c.h.b16 %v100
    %v181 = vunpack.c.l.b16 %v101
    %v182 = vunpack.c.h.b16 %v101
    %v183 = vunpack.c.l.b16 %v102
    %v184 = vunpack.c.h.b16 %v102
    %v185 = vunpack.c.l.b16 %v103
    %v186 = vunpack.c.h.b16 %v103
    %v187 = vunpack.c.l.b16 %v104
    %v188 = vunpack.c.h.b16 %v104
    %v189 = vunpack.c.l.b16 %v105
    %v190 = vunpack.c.h.b16 %v105
    %v191 = vunpack.c.l.b16 %v106
    %v192 = vunpack.c.h.b16 %v106
    %v193 = vunpack.c.l.b16 %v107
    %v194 = vunpack.c.h.b16 %v107
    %v195 = vunpack.c.l.b16 %v108
    %v196 = vunpack.c.h.b16 %v108
    %v197 = vunpack.c.l.b16 %v109
    %v198 = vunpack.c.h.b16 %v109
    %v199 = vunpack.c.l.b16 %v110
    %v200 = vunpack.c.h.b16 %v110
    %v201 = vunpack.c.l.b16 %v111
    %v202 = vunpack.c.h.b16 %v111
    %v203 = vunpack.c.l.b16 %v112
    %v204 = vunpack.c.h.b16 %v112
    %v205 = vunpack.c.l.b16 %v113
    %v206 = vunpack.c.h.b16 %v113
    %v207 = vunpack.c.l.b16 %v114
    %v208 = vunpack.c.h.b16 %v114
    %v209 = vunpack.c.l.b16 %v115
    %v210 = vunpack.c.h.b16 %v115
    %v211 = vunpack.c.l.b16 %v116
    %v212 = vunpack.c.h.b16 %v116
    %v213 = vpack.c.b16 %v151, %v149
    %v214 = vpack.c.b16 %v152, %v150
    %v215 = vpack.c.b16 %v155, %v153
    %v216 = vpack.c.b16 %v156, %v154
    %v217 = vpack.c.b16 %v159, %v157
    %v218 = vpack.c.b16 %v160, %v158
    %v219 = vpack.c.b16 %v163, %v161
    %v220 = vpack.c.b16 %v164, %v162
    %v221 = vpack.c.b16 %v167, %v165
    %v222 = vpack.c.b16 %v168, %v166
    %v223 = vpack.c.b16 %v171, %v169
    %v224 = vpack.c.b16 %v172, %v170
    %v225 = vpack.c.b16 %v175, %v173
    %v226 = vpack.c.b16 %v176, %v174
    %v227 = vpack.c.b16 %v179, %v177
    %v228 = vpack.c.b16 %v180, %v178
    %v229 = vpack.c.b16 %v183, %v181
    %v230 = vpack.c.b16 %v184, %v182
    %v231 = vpack.c.b16 %v187, %v185
    %v232 = vpack.c.b16 %v188, %v186
    %v233 = vpack.c.b16 %v191, %v189
    %v234 = vpack.c.b16 %v192, %v190
    %v235 = vpack.c.b16 %v195, %v193
    %v236 = vpack.c.b16 %v196, %v194
    %v237 = vpack.c.b16 %v199, %v197
    %v238 = vpack.c.b16 %v200, %v198
    %v239 = vpack.c.b16 %v203, %v201
    %v240 = vpack.c.b16 %v204, %v202
    %v241 = vpack.c.b16 %v207, %v205
    %v242 = vpack.c.b16 %v208, %v206
    %v243 = vpack.c.b16 %v211, %v209
    %v244 = vpack.c.b16 %v212, %v210
    %277 = vmatprep.subr.bf16.mxu0 %v214
    %278 = vmatpush1.bf16.msra.mxu0 %v213
    %279 = vmatprep.subr.bf16.mxu0 %v216
    %280 = vmatpush1.bf16.msra.mxu0 %v215
    %281 = vmatprep.subr.bf16.mxu0 %v218
    %282 = vmatpush1.bf16.msra.mxu0 %v217
    %283 = vmatprep.subr.bf16.mxu0 %v220
    %284 = vmatpush1.bf16.msra.mxu0 %v219
    %285 = vmatprep.subr.bf16.mxu0 %v222
    %286 = vmatpush1.bf16.msra.mxu0 %v221
    %287 = vmatprep.subr.bf16.mxu0 %v224
    %288 = vmatpush1.bf16.msra.mxu0 %v223
    %289 = vmatprep.subr.bf16.mxu0 %v226
    %290 = vmatpush1.bf16.msra.mxu0 %v225
    %291 = vmatprep.subr.bf16.mxu0 %v228
    %292 = vmatpush1.bf16.msra.mxu0 %v227
    %293 = vmatprep.subr.bf16.mxu0 %v230
    %294 = vmatpush1.bf16.msra.mxu0 %v229
    %295 = vmatprep.subr.bf16.mxu0 %v232
    %296 = vmatpush1.bf16.msra.mxu0 %v231
    %297 = vmatprep.subr.bf16.mxu0 %v234
    %298 = vmatpush1.bf16.msra.mxu0 %v233
    %299 = vmatprep.subr.bf16.mxu0 %v236
    %300 = vmatpush1.bf16.msra.mxu0 %v235
    %301 = vmatprep.subr.bf16.mxu0 %v238
    %302 = vmatpush1.bf16.msra.mxu0 %v237
    %303 = vmatprep.subr.bf16.mxu0 %v240
    %304 = vmatpush1.bf16.msra.mxu0 %v239
    %305 = vmatprep.subr.bf16.mxu0 %v242
    %306 = vmatpush1.bf16.msra.mxu0 %v241
    %307 = vmatprep.subr.bf16.mxu0 %v244
    %308 = vmatpush1.bf16.msra.mxu0 %v243
    %309 = vmatprep.mubr.bf16.mxu0 %v84
    %310 = vmatmul.mubr.bf16.gmra.mrb[0].mxu0 %v83
    %v311 = vpop.f32.mrb[0].mxu0
    %v312 = vadd.f32 0.0, %v311
    %v313 = vpop.f32.mrb[0].mxu0
    %v314 = vadd.f32 0.0, %v313
    %v315 = vpop.f32.mrb[0].mxu0
    %v316 = vpop.f32.mrb[0].mxu0
    %317 = vdwg.mxu0
    %318 = vmatprep.subr.bf16.mxu0 %v214
    %319 = vmatpush1.bf16.msra.mxu0 %v213
    %320 = vmatprep.subr.bf16.mxu0 %v216
    %321 = vmatpush1.bf16.msra.mxu0 %v215
    %322 = vmatprep.subr.bf16.mxu0 %v218
    %323 = vmatpush1.bf16.msra.mxu0 %v217
    %324 = vmatprep.subr.bf16.mxu0 %v220
    %325 = vmatpush1.bf16.msra.mxu0 %v219
    %326 = vmatprep.subr.bf16.mxu0 %v222
    %327 = vmatpush1.bf16.msra.mxu0 %v221
    %328 = vmatprep.subr.bf16.mxu0 %v224
    %329 = vmatpush1.bf16.msra.mxu0 %v223
    %330 = vmatprep.subr.bf16.mxu0 %v226
    %331 = vmatpush1.bf16.msra.mxu0 %v225
    %332 = vmatprep.subr.bf16.mxu0 %v228
    %333 = vmatpush1.bf16.msra.mxu0 %v227
    %334 = vmatprep.subr.bf16.mxu0 %v230
    %335 = vmatpush1.bf16.msra.mxu0 %v229
    %336 = vmatprep.subr.bf16.mxu0 %v232
    %337 = vmatpush1.bf16.msra.mxu0 %v231
    %338 = vmatprep.subr.bf16.mxu0 %v234
    %339 = vmatpush1.bf16.msra.mxu0 %v233
    %340 = vmatprep.subr.bf16.mxu0 %v236
    %341 = vmatpush1.bf16.msra.mxu0 %v235
    %342 = vmatprep.subr.bf16.mxu0 %v238
    %343 = vmatpush1.bf16.msra.mxu0 %v237
    %344 = vmatprep.subr.bf16.mxu0 %v240
    %345 = vmatpush1.bf16.msra.mxu0 %v239
    %346 = vmatprep.subr.bf16.mxu0 %v242
    %347 = vmatpush1.bf16.msra.mxu0 %v241
    %348 = vmatprep.subr.bf16.mxu0 %v244
    %349 = vmatpush1.bf16.msra.mxu0 %v243
    %350 = vmatprep.mubr.bf16.mxu0 %v78
    %351 = vmatmul.mubr.bf16.gmra.mrb[0].mxu0 %v77
    %v352 = vpop.f32.mrb[0].mxu0
    %v353 = vadd.f32 %v312, %v352
    %v354 = vpop.f32.mrb[0].mxu0
    %v355 = vadd.f32 %v314, %v354
    %v356 = vpop.f32.mrb[0].mxu0
    %v357 = vpop.f32.mrb[0].mxu0
    %358 = vdwg.mxu0
    %s359 = sld [smem:[#allocation7]]
    %s360 = sld [smem:[#allocation7 + $0x80]]
    %s361 = sld [smem:[#allocation7 + $0x100]]
    %s362 = sld [smem:[#allocation7 + $0x180]]
    %s363 = sld [smem:[#allocation7 + $0x200]]
    %s364 = sld [smem:[#allocation7 + $0x280]]
    %s365 = sld [smem:[#allocation7 + $0x300]]
    %s366 = sld [smem:[#allocation7 + $0x380]]
    %s367 = sld [smem:[#allocation7 + $0x1]]
    %s368 = sld [smem:[#allocation7 + $0x81]]
    %s369 = sld [smem:[#allocation7 + $0x101]]
    %s370 = sld [smem:[#allocation7 + $0x181]]
    %s371 = sld [smem:[#allocation7 + $0x201]]
    %s372 = sld [smem:[#allocation7 + $0x281]]
    %s373 = sld [smem:[#allocation7 + $0x301]]
    %s374 = sld [smem:[#allocation7 + $0x381]]
    %s375 = sld [smem:[#allocation8]]
    %s376 = sld [smem:[#allocation8 + $0x1]]
    %s377 = sld [smem:[#allocation8 + $0x2]]
    %s378 = sld [smem:[#allocation8 + $0x3]]
    %s379 = sld [smem:[#allocation8 + $0x4]]
    %s380 = sld [smem:[#allocation8 + $0x5]]
    %s381 = sld [smem:[#allocation8 + $0x6]]
    %s382 = sld [smem:[#allocation8 + $0x7]]
    %s383 = sld [smem:[#allocation10]]
    %s384 = sld [smem:[#allocation10 + $0x1]]
    %s385 = sld [smem:[#allocation10 + $0x2]]
    %s386 = sld [smem:[#allocation10 + $0x3]]
    %s387 = sld [smem:[#allocation10 + $0x4]]
    %s388 = sld [smem:[#allocation10 + $0x5]]
    %s389 = sld [smem:[#allocation10 + $0x6]]
    %s390 = sld [smem:[#allocation10 + $0x7]]
    %s391 = sld [smem:[#allocation2]]
    %v392 = vstv %s391
    %v393 = vstv %s359
    %v394 = vmul.f32 %v353, %v393
    %v395 = vstv %s367
    %v396 = vmul.f32 %v355, %v395
    %v397 = vadd.f32 %v394, %v396
    %v398 = vstv %s375
    %v399 = vadd.f32 %v397, %v398
    %v400 = vmax.f32 %v399, 0.0
    %v401 = vstv %s383
    %v402 = vmul.f32 %v400, %v401
    %v403 = vadd.f32 %v392, %v402
    %v404 = vstv %s360
    %v405 = vmul.f32 %v353, %v404
    %v406 = vstv %s368
    %v407 = vmul.f32 %v355, %v406
    %v408 = vadd.f32 %v405, %v407
    %v409 = vstv %s376
    %v410 = vadd.f32 %v408, %v409
    %v411 = vmax.f32 %v410, 0.0
    %v412 = vstv %s384
    %v413 = vmul.f32 %v411, %v412
    %v414 = vadd.f32 %v403, %v413
    %v415 = vstv %s361
    %v416 = vmul.f32 %v353, %v415
    %v417 = vstv %s369
    %v418 = vmul.f32 %v355, %v417
    %v419 = vadd.f32 %v416, %v418
    %v420 = vstv %s377
    %v421 = vadd.f32 %v419, %v420
    %v422 = vmax.f32 %v421, 0.0
    %v423 = vstv %s385
    %v424 = vmul.f32 %v422, %v423
    %v425 = vadd.f32 %v414, %v424
    %v426 = vstv %s362
    %v427 = vmul.f32 %v353, %v426
    %v428 = vstv %s370
    %v429 = vmul.f32 %v355, %v428
    %v430 = vadd.f32 %v427, %v429
    %v431 = vstv %s378
    %v432 = vadd.f32 %v430, %v431
    %v433 = vmax.f32 %v432, 0.0
    %v434 = vstv %s386
    %v435 = vmul.f32 %v433, %v434
    %v436 = vadd.f32 %v425, %v435
    %v437 = vstv %s363
    %v438 = vmul.f32 %v353, %v437
    %v439 = vstv %s371
    %v440 = vmul.f32 %v355, %v439
    %v441 = vadd.f32 %v438, %v440
    %v442 = vstv %s379
    %v443 = vadd.f32 %v441, %v442
    %v444 = vmax.f32 %v443, 0.0
    %v445 = vstv %s387
    %v446 = vmul.f32 %v444, %v445
    %v447 = vadd.f32 %v436, %v446
    %v448 = vstv %s364
    %v449 = vmul.f32 %v353, %v448
    %v450 = vstv %s372
    %v451 = vmul.f32 %v355, %v450
    %v452 = vadd.f32 %v449, %v451
    %v453 = vstv %s380
    %v454 = vadd.f32 %v452, %v453
    %v455 = vmax.f32 %v454, 0.0
    %v456 = vstv %s388
    %v457 = vmul.f32 %v455, %v456
    %v458 = vadd.f32 %v447, %v457
    %v459 = vstv %s365
    %v460 = vmul.f32 %v353, %v459
    %v461 = vstv %s373
    %v462 = vmul.f32 %v355, %v461
    %v463 = vadd.f32 %v460, %v462
    %v464 = vstv %s381
    %v465 = vadd.f32 %v463, %v464
    %v466 = vmax.f32 %v465, 0.0
    %v467 = vstv %s389
    %v468 = vmul.f32 %v466, %v467
    %v469 = vadd.f32 %v458, %v468
    %v470 = vstv %s366
    %v471 = vmul.f32 %v353, %v470
    %v472 = vstv %s374
    %v473 = vmul.f32 %v355, %v472
    %v474 = vadd.f32 %v471, %v473
    %v475 = vstv %s382
    %v476 = vadd.f32 %v474, %v475
    %v477 = vmax.f32 %v476, 0.0
    %v478 = vstv %s390
    %v479 = vmul.f32 %v477, %v478
    %v480 = vadd.f32 %v469, %v479
    %v481 = vsub.f32 0.0, %v480
    %v482 = vmul.f32 %v481, 1.442695
    %v483 = vpow.pop %v482
    %v484 = vadd.f32 %v483, 1.0
    %v485 = vrcp.pop %v484
    %v486 = vmul.f32 1.0, %v485
    %487 = vst [vmem:[#allocation11] sm:$0xff] %v486
    // Predicated region
    $region42: #{tpu_custom_call.1} parent=1 // pred_check
      _
    $region43: #{tpu_custom_call.1} parent=1 // pred_check_branch
      %489 = sbr.rel (0) target = $region45
    $region44: #{tpu_custom_call.1} parent=1 // pred_region
      %s491 = ssub.s32 128, 128
      %492 = vsyncadd [#allocation5], %s491
      %s494 = sshll.u32 [#allocation11], 4
      %s495 = int_to_ptr.vmem [resolvable:$true] %s494
      %497 = dma.vmem_to_hbm [thread:$0]  %s495, 128, %s6, [#allocation5]
    $region45: #{tpu_custom_call.1} parent=1 // pred_fallthru
      _
    // Predicated region
    $region46: #{tpu_custom_call.1} parent=1 // pred_check
      _
    $region47: #{tpu_custom_call.1} parent=1 // pred_check_branch
      %499 = sbr.rel (0) target = $region49
    $region48: #{tpu_custom_call.1} parent=1 // pred_region
      %500 = dma.done [#allocation5], 128
    $region49: #{tpu_custom_call.1} parent=1 // pred_fallthru
      _
    %501 = vsyncpa [#allocation4], 1
    %502 = vsyncpa [#allocation5], 1
    %503 = vsyncpa [#allocation6], 1
    %504 = vsyncpa [#allocation9], 1

</llo_original>
